<compile_context>
chip_gen: v7x
topology: tpu7x:2x2x1
jax: 0.10.0
libtpu: 0.0.40
codegen_flags: <defaults>
</compile_context>

<pallas_src>
import jax
import jax.numpy as jnp
from jax import lax
from jax.experimental import pallas as pl
from jax.experimental.pallas import tpu as pltpu

EPS = 1e-5


def _fold_bn(gamma, beta, mean, var):
    scale = gamma / jnp.sqrt(var + EPS)
    bias = beta - mean * scale
    return scale, bias


# ---------------------------------------------------------------------------
# Fused kernel (one batch per grid step):
#   x:   (1, Hc, Wc, Cin)   cropped NHWC input block
#   w1:  (Cin, hidden)      1x1 conv weight with BN1 scale folded in
#   b1:  (1, hidden)        folded BN1 bias
#   wdw: (3, 3, hidden)     depthwise weight with BN2 scale folded in
#   b2:  (1, hidden)        folded BN2 bias
#   o:   (1, Hc-2, Wc-2, hidden)
# ---------------------------------------------------------------------------
def make_fused_adapt_kernel(Hc, Wc, hidden):
    Ho, Wo = Hc - 2, Wc - 2

    def kernel(x_ref, w1_ref, b1_ref, wdw_ref, b2_ref, o_ref):
        cin = x_ref.shape[-1]

        # ---- stage 1: 1x1 conv as an MXU matmul + bias + ReLU (y stays on-chip) ----
        x = x_ref[...].reshape(Hc * Wc, cin)
        y = jnp.dot(x, w1_ref[...], preferred_element_type=jnp.float32)
        y = jnp.maximum(y + b1_ref[...], 0.0)              # BN1 scale already in w1
        y = y.reshape(Hc, Wc, hidden)

        # ---- stage 2: depthwise 3x3 VALID conv + bias + ReLU ----
        w = wdw_ref[...].astype(jnp.float32)               # (3, 3, hidden)
        # Factorized stencil: H-tap accumulation first (cheap major-dim slices),
        # then combine the three W-tap partials (only 2 sublane-offset slices).
        partials = []
        for dj in range(3):
            s = y[0:Ho, :, :] * w[0, dj, :]
            s = s + y[1:1 + Ho, :, :] * w[1, dj, :]
            s = s + y[2:2 + Ho, :, :] * w[2, dj, :]
            partials.append(s)                             # (Ho, Wc, hidden)
        out = (partials[0][:, 0:Wo, :]
               + partials[1][:, 1:1 + Wo, :]
               + partials[2][:, 2:2 + Wo, :])
        out = jnp.maximum(out + b2_ref[...], 0.0)          # BN2 scale already in wdw
        o_ref[...] = out.reshape(1, Ho, Wo, hidden).astype(o_ref.dtype)

    return kernel


# ---------------------------------------------------------------------------
# Wrapper: NCHW in -> NCHW out (PyTorch convention).  Production code should
# use NHWC end-to-end to drop the boundary transposes entirely.
# ---------------------------------------------------------------------------
def adapt_non_shared_forward(x_nchw, params, center_crop_size=0):
    N, Cin, H, W = x_nchw.shape
    hidden = params["w1"].shape[0]

    # Fold inference-mode BN into the conv weights / biases at trace time.
    s1, b1 = _fold_bn(params["g1"], params["b1"], params["m1"], params["v1"])
    s2, b2 = _fold_bn(params["g2"], params["b2"], params["m2"], params["v2"])
    w1f = (params["w1"].T * s1[None, :]).astype(jnp.float32)                 # (Cin, hidden)
    wdwf = (jnp.transpose(params["wdw"], (1, 2, 0))
            * s2[None, None, :]).astype(jnp.float32)                         # (3, 3, hidden)
    b1 = b1.reshape(1, hidden).astype(jnp.float32)
    b2 = b2.reshape(1, hidden).astype(jnp.float32)

    # NCHW -> NHWC (channels on the lane axis) and static center crop.  Because the
    # 1x1 conv is pointwise in space, cropping the input before it is equivalent to
    # cropping its output; XLA fuses the transpose + slice into one pass over x.
    x_nhwc = jnp.transpose(x_nchw, (0, 2, 3, 1))
    if center_crop_size:
        l = (W - center_crop_size) // 2       # PyTorch uses x.size(3) for both dims
        r = l + center_crop_size
        x_nhwc = x_nhwc[:, l:r, l:r, :]
    Hc, Wc = x_nhwc.shape[1], x_nhwc.shape[2]
    Ho, Wo = Hc - 2, Wc - 2

    out_nhwc = pl.pallas_call(
        make_fused_adapt_kernel(Hc, Wc, hidden),
        out_shape=jax.ShapeDtypeStruct((N, Ho, Wo, hidden), x_nchw.dtype),
        grid=(N,),
        in_specs=[
            pl.BlockSpec((1, Hc, Wc, Cin), lambda n: (n, 0, 0, 0)),
            pl.BlockSpec((Cin, hidden), lambda n: (0, 0)),
            pl.BlockSpec((1, hidden), lambda n: (0, 0)),
            pl.BlockSpec((3, 3, hidden), lambda n: (0, 0, 0)),
            pl.BlockSpec((1, hidden), lambda n: (0, 0)),
        ],
        out_specs=pl.BlockSpec((1, Ho, Wo, hidden), lambda n: (n, 0, 0, 0)),
        compiler_params=pltpu.CompilerParams(
            dimension_semantics=("parallel",)),
    )(x_nhwc, w1f, b1, wdwf, b2)

    return jnp.transpose(out_nhwc, (0, 3, 1, 2))           # back to NCHW


# ---------------------------------------------------------------------------
# Pure-JAX reference (lax convs, NCHW) for correctness check
# ---------------------------------------------------------------------------
def reference(x_nchw, params, center_crop_size=0):
    def bn(x, g, b, m, v):
        return (x - m[None, :, None, None]) / jnp.sqrt(v + EPS)[None, :, None, None] \
               * g[None, :, None, None] + b[None, :, None, None]

    w1 = params["w1"][:, :, None, None]                    # (hidden, Cin, 1, 1)
    y = lax.conv_general_dilated(x_nchw, w1, (1, 1), "VALID",
                                 dimension_numbers=("NCHW", "OIHW", "NCHW"))
    y = jnp.maximum(bn(y, params["g1"], params["b1"], params["m1"], params["v1"]), 0.0)

    if center_crop_size:
        l = (y.shape[3] - center_crop_size) // 2
        r = l + center_crop_size
        y = y[:, :, l:r, l:r]

    wdw = params["wdw"][:, None, :, :]                     # (hidden, 1, 3, 3)
    z = lax.conv_general_dilated(y, wdw, (1, 1), "VALID",
                                 feature_group_count=y.shape[1],
                                 dimension_numbers=("NCHW", "OIHW", "NCHW"))
    z = jnp.maximum(bn(z, params["g2"], params["b2"], params["m2"], params["v2"]), 0.0)
    return z


if __name__ == "__main__":
    key = jax.random.PRNGKey(0)
    N, Cin, H, W = 2, 8, 16, 16
    hidden = 16
    center_crop_size = 8

    ks = jax.random.split(key, 11)
    x = jax.random.normal(ks[0], (N, Cin, H, W), jnp.float32)
    params = {
        # adapt: 1x1 conv weight (PyTorch layout OIHW squeezed to (O, I))
        "w1": jax.random.normal(ks[1], (hidden, Cin), jnp.float32) * 0.1,
        "g1": jax.random.uniform(ks[2], (hidden,), jnp.float32, 0.5, 1.5),
        "b1": jax.random.normal(ks[3], (hidden,), jnp.float32) * 0.1,
        "m1": jax.random.normal(ks[4], (hidden,), jnp.float32) * 0.1,
        "v1": jax.random.uniform(ks[5], (hidden,), jnp.float32, 0.5, 1.5),
        # dw_reduce: depthwise 3x3 weight (PyTorch (hidden, 1, 3, 3) squeezed)
        "wdw": jax.random.normal(ks[6], (hidden, 3, 3), jnp.float32) * 0.1,
        "g2": jax.random.uniform(ks[7], (hidden,), jnp.float32, 0.5, 1.5),
        "b2": jax.random.normal(ks[8], (hidden,), jnp.float32) * 0.1,
        "m2": jax.random.normal(ks[9], (hidden,), jnp.float32) * 0.1,
        "v2": jax.random.uniform(ks[10], (hidden,), jnp.float32, 0.5, 1.5),
    }

    # With center crop
    out = jax.block_until_ready(adapt_non_shared_forward(x, params, center_crop_size))
    ref = jax.block_until_ready(reference(x, params, center_crop_size))
    assert out.shape == ref.shape, (out.shape, ref.shape)
    assert jnp.allclose(out, ref, atol=1e-4, rtol=1e-4), \
        float(jnp.max(jnp.abs(out - ref)))

    # Without center crop
    out0 = jax.block_until_ready(adapt_non_shared_forward(x, params, 0))
    ref0 = jax.block_until_ready(reference(x, params, 0))
    assert out0.shape == ref0.shape, (out0.shape, ref0.shape)
    assert jnp.allclose(out0, ref0, atol=1e-4, rtol=1e-4), \
        float(jnp.max(jnp.abs(out0 - ref0)))

    print("KERNEL_OK")
</pallas_src>

<mosaic_0001>
module attributes {stable_mosaic.version = 11 : i64} {
  func.func @kernel(%arg0: i32, %arg1: memref<1x8x8x8xf32, #tpu.memory_space<vmem>>, %arg2: memref<8x16xf32, #tpu.memory_space<vmem>>, %arg3: memref<1x16xf32, #tpu.memory_space<vmem>>, %arg4: memref<3x3x16xf32, #tpu.memory_space<vmem>>, %arg5: memref<1x16xf32, #tpu.memory_space<vmem>>, %arg6: memref<1x6x6x16xf32, #tpu.memory_space<vmem>>) attributes {dimension_semantics = [#tpu.dimension_semantics<parallel>], iteration_bounds = array<i64: 2>, scalar_prefetch = 0 : i64, scratch_operands = 0 : i64, tpu.core_type = #tpu.core_type<tc>, window_params = [{transform_indices = @transform_0, window_bounds = array<i64: 1, 8, 8, 8>}, {pipeline_mode = #tpu.pipeline_mode<synchronous>, transform_indices = @transform_1, window_bounds = array<i64: 8, 16>}, {pipeline_mode = #tpu.pipeline_mode<synchronous>, transform_indices = @transform_2, window_bounds = array<i64: 1, 16>}, {pipeline_mode = #tpu.pipeline_mode<synchronous>, transform_indices = @transform_3, window_bounds = array<i64: 3, 3, 16>}, {pipeline_mode = #tpu.pipeline_mode<synchronous>, transform_indices = @transform_4, window_bounds = array<i64: 1, 16>}, {transform_indices = @transform_5, window_bounds = array<i64: 1, 6, 6, 16>}]} {
    %c0 = arith.constant 0 : index
    %c0_0 = arith.constant 0 : index
    %c0_1 = arith.constant 0 : index
    %c0_2 = arith.constant 0 : index
    %0 = vector.load %arg1[%c0, %c0_0, %c0_1, %c0_2] : memref<1x8x8x8xf32, #tpu.memory_space<vmem>>, vector<1x8x8x8xf32>
    %1 = vector.shape_cast %0 : vector<1x8x8x8xf32> to vector<64x8xf32>
    %c0_3 = arith.constant 0 : index
    %c0_4 = arith.constant 0 : index
    %2 = vector.load %arg2[%c0_3, %c0_4] : memref<8x16xf32, #tpu.memory_space<vmem>>, vector<8x16xf32>
    %cst = arith.constant dense<0.000000e+00> : vector<64x16xf32>
    %3 = tpu.matmul %1, %2, %cst {dimension_numbers = #tpu.dot_dimension_numbers<[1], [0], [0], [1], [0, 0, 1, 1], [], []>} : vector<64x8xf32>, vector<8x16xf32>, vector<64x16xf32> -> vector<64x16xf32>
    %c0_5 = arith.constant 0 : index
    %c0_6 = arith.constant 0 : index
    %4 = vector.load %arg3[%c0_5, %c0_6] : memref<1x16xf32, #tpu.memory_space<vmem>>, vector<1x16xf32>
    %5 = vector.broadcast %4 : vector<1x16xf32> to vector<64x16xf32>
    %6 = arith.addf %3, %5 : vector<64x16xf32>
    %cst_7 = arith.constant 0.000000e+00 : f32
    %7 = vector.broadcast %cst_7 : f32 to vector<64x16xf32>
    %8 = arith.maximumf %6, %7 : vector<64x16xf32>
    %9 = vector.shape_cast %8 : vector<64x16xf32> to vector<8x8x16xf32>
    %c0_8 = arith.constant 0 : index
    %c0_9 = arith.constant 0 : index
    %c0_10 = arith.constant 0 : index
    %10 = vector.load %arg4[%c0_8, %c0_9, %c0_10] : memref<3x3x16xf32, #tpu.memory_space<vmem>>, vector<3x3x16xf32>
    %11 = vector.extract_strided_slice %9 {offsets = [0, 0, 0], sizes = [6, 8, 16], strides = [1, 1, 1]} : vector<8x8x16xf32> to vector<6x8x16xf32>
    %12 = vector.extract_strided_slice %10 {offsets = [0, 0, 0], sizes = [1, 1, 16], strides = [1, 1, 1]} : vector<3x3x16xf32> to vector<1x1x16xf32>
    %13 = vector.shape_cast %12 : vector<1x1x16xf32> to vector<16xf32>
    %14 = vector.shape_cast %13 : vector<16xf32> to vector<1x1x16xf32>
    %15 = vector.broadcast %14 : vector<1x1x16xf32> to vector<6x8x16xf32>
    %16 = arith.mulf %11, %15 : vector<6x8x16xf32>
    %17 = vector.extract_strided_slice %9 {offsets = [1, 0, 0], sizes = [6, 8, 16], strides = [1, 1, 1]} : vector<8x8x16xf32> to vector<6x8x16xf32>
    %18 = vector.extract_strided_slice %10 {offsets = [1, 0, 0], sizes = [1, 1, 16], strides = [1, 1, 1]} : vector<3x3x16xf32> to vector<1x1x16xf32>
    %19 = vector.shape_cast %18 : vector<1x1x16xf32> to vector<16xf32>
    %20 = vector.shape_cast %19 : vector<16xf32> to vector<1x1x16xf32>
    %21 = vector.broadcast %20 : vector<1x1x16xf32> to vector<6x8x16xf32>
    %22 = arith.mulf %17, %21 : vector<6x8x16xf32>
    %23 = arith.addf %16, %22 : vector<6x8x16xf32>
    %24 = vector.extract_strided_slice %9 {offsets = [2, 0, 0], sizes = [6, 8, 16], strides = [1, 1, 1]} : vector<8x8x16xf32> to vector<6x8x16xf32>
    %25 = vector.extract_strided_slice %10 {offsets = [2, 0, 0], sizes = [1, 1, 16], strides = [1, 1, 1]} : vector<3x3x16xf32> to vector<1x1x16xf32>
    %26 = vector.shape_cast %25 : vector<1x1x16xf32> to vector<16xf32>
    %27 = vector.shape_cast %26 : vector<16xf32> to vector<1x1x16xf32>
    %28 = vector.broadcast %27 : vector<1x1x16xf32> to vector<6x8x16xf32>
    %29 = arith.mulf %24, %28 : vector<6x8x16xf32>
    %30 = arith.addf %23, %29 : vector<6x8x16xf32>
    %31 = vector.extract_strided_slice %9 {offsets = [0, 0, 0], sizes = [6, 8, 16], strides = [1, 1, 1]} : vector<8x8x16xf32> to vector<6x8x16xf32>
    %32 = vector.extract_strided_slice %10 {offsets = [0, 1, 0], sizes = [1, 1, 16], strides = [1, 1, 1]} : vector<3x3x16xf32> to vector<1x1x16xf32>
    %33 = vector.shape_cast %32 : vector<1x1x16xf32> to vector<16xf32>
    %34 = vector.shape_cast %33 : vector<16xf32> to vector<1x1x16xf32>
    %35 = vector.broadcast %34 : vector<1x1x16xf32> to vector<6x8x16xf32>
    %36 = arith.mulf %31, %35 : vector<6x8x16xf32>
    %37 = vector.extract_strided_slice %9 {offsets = [1, 0, 0], sizes = [6, 8, 16], strides = [1, 1, 1]} : vector<8x8x16xf32> to vector<6x8x16xf32>
    %38 = vector.extract_strided_slice %10 {offsets = [1, 1, 0], sizes = [1, 1, 16], strides = [1, 1, 1]} : vector<3x3x16xf32> to vector<1x1x16xf32>
    %39 = vector.shape_cast %38 : vector<1x1x16xf32> to vector<16xf32>
    %40 = vector.shape_cast %39 : vector<16xf32> to vector<1x1x16xf32>
    %41 = vector.broadcast %40 : vector<1x1x16xf32> to vector<6x8x16xf32>
    %42 = arith.mulf %37, %41 : vector<6x8x16xf32>
    %43 = arith.addf %36, %42 : vector<6x8x16xf32>
    %44 = vector.extract_strided_slice %9 {offsets = [2, 0, 0], sizes = [6, 8, 16], strides = [1, 1, 1]} : vector<8x8x16xf32> to vector<6x8x16xf32>
    %45 = vector.extract_strided_slice %10 {offsets = [2, 1, 0], sizes = [1, 1, 16], strides = [1, 1, 1]} : vector<3x3x16xf32> to vector<1x1x16xf32>
    %46 = vector.shape_cast %45 : vector<1x1x16xf32> to vector<16xf32>
    %47 = vector.shape_cast %46 : vector<16xf32> to vector<1x1x16xf32>
    %48 = vector.broadcast %47 : vector<1x1x16xf32> to vector<6x8x16xf32>
    %49 = arith.mulf %44, %48 : vector<6x8x16xf32>
    %50 = arith.addf %43, %49 : vector<6x8x16xf32>
    %51 = vector.extract_strided_slice %9 {offsets = [0, 0, 0], sizes = [6, 8, 16], strides = [1, 1, 1]} : vector<8x8x16xf32> to vector<6x8x16xf32>
    %52 = vector.extract_strided_slice %10 {offsets = [0, 2, 0], sizes = [1, 1, 16], strides = [1, 1, 1]} : vector<3x3x16xf32> to vector<1x1x16xf32>
    %53 = vector.shape_cast %52 : vector<1x1x16xf32> to vector<16xf32>
    %54 = vector.shape_cast %53 : vector<16xf32> to vector<1x1x16xf32>
    %55 = vector.broadcast %54 : vector<1x1x16xf32> to vector<6x8x16xf32>
    %56 = arith.mulf %51, %55 : vector<6x8x16xf32>
    %57 = vector.extract_strided_slice %9 {offsets = [1, 0, 0], sizes = [6, 8, 16], strides = [1, 1, 1]} : vector<8x8x16xf32> to vector<6x8x16xf32>
    %58 = vector.extract_strided_slice %10 {offsets = [1, 2, 0], sizes = [1, 1, 16], strides = [1, 1, 1]} : vector<3x3x16xf32> to vector<1x1x16xf32>
    %59 = vector.shape_cast %58 : vector<1x1x16xf32> to vector<16xf32>
    %60 = vector.shape_cast %59 : vector<16xf32> to vector<1x1x16xf32>
    %61 = vector.broadcast %60 : vector<1x1x16xf32> to vector<6x8x16xf32>
    %62 = arith.mulf %57, %61 : vector<6x8x16xf32>
    %63 = arith.addf %56, %62 : vector<6x8x16xf32>
    %64 = vector.extract_strided_slice %9 {offsets = [2, 0, 0], sizes = [6, 8, 16], strides = [1, 1, 1]} : vector<8x8x16xf32> to vector<6x8x16xf32>
    %65 = vector.extract_strided_slice %10 {offsets = [2, 2, 0], sizes = [1, 1, 16], strides = [1, 1, 1]} : vector<3x3x16xf32> to vector<1x1x16xf32>
    %66 = vector.shape_cast %65 : vector<1x1x16xf32> to vector<16xf32>
    %67 = vector.shape_cast %66 : vector<16xf32> to vector<1x1x16xf32>
    %68 = vector.broadcast %67 : vector<1x1x16xf32> to vector<6x8x16xf32>
    %69 = arith.mulf %64, %68 : vector<6x8x16xf32>
    %70 = arith.addf %63, %69 : vector<6x8x16xf32>
    %71 = vector.extract_strided_slice %30 {offsets = [0, 0, 0], sizes = [6, 6, 16], strides = [1, 1, 1]} : vector<6x8x16xf32> to vector<6x6x16xf32>
    %72 = vector.extract_strided_slice %50 {offsets = [0, 1, 0], sizes = [6, 6, 16], strides = [1, 1, 1]} : vector<6x8x16xf32> to vector<6x6x16xf32>
    %73 = arith.addf %71, %72 : vector<6x6x16xf32>
    %74 = vector.extract_strided_slice %70 {offsets = [0, 2, 0], sizes = [6, 6, 16], strides = [1, 1, 1]} : vector<6x8x16xf32> to vector<6x6x16xf32>
    %75 = arith.addf %73, %74 : vector<6x6x16xf32>
    %c0_11 = arith.constant 0 : index
    %c0_12 = arith.constant 0 : index
    %76 = vector.load %arg5[%c0_11, %c0_12] : memref<1x16xf32, #tpu.memory_space<vmem>>, vector<1x16xf32>
    %77 = vector.shape_cast %76 : vector<1x16xf32> to vector<1x1x16xf32>
    %78 = vector.broadcast %77 : vector<1x1x16xf32> to vector<6x6x16xf32>
    %79 = arith.addf %75, %78 : vector<6x6x16xf32>
    %cst_13 = arith.constant 0.000000e+00 : f32
    %80 = vector.broadcast %cst_13 : f32 to vector<6x6x16xf32>
    %81 = arith.maximumf %79, %80 : vector<6x6x16xf32>
    %82 = vector.shape_cast %81 : vector<6x6x16xf32> to vector<1x6x6x16xf32>
    %c0_14 = arith.constant 0 : index
    %c0_15 = arith.constant 0 : index
    %c0_16 = arith.constant 0 : index
    %c0_17 = arith.constant 0 : index
    %83 = vector.load %arg6[%c0_14, %c0_15, %c0_16, %c0_17] : memref<1x6x6x16xf32, #tpu.memory_space<vmem>>, vector<1x6x6x16xf32>
    tpu.vector_store %arg6[%c0_14, %c0_15, %c0_16, %c0_17], %82 {strides = array<i32>} : memref<1x6x6x16xf32, #tpu.memory_space<vmem>>, vector<1x6x6x16xf32>,
    return
  }
  func.func @transform_0(%arg0: i32) -> (i32, i32, i32, i32) {
    %c0_i32 = arith.constant 0 : i32
    %c0_i32_0 = arith.constant 0 : i32
    %c0_i32_1 = arith.constant 0 : i32
    %c0_i32_2 = arith.constant 0 : i32
    return %arg0, %c0_i32, %c0_i32_0, %c0_i32_1 : i32, i32, i32, i32
  }
  func.func @transform_1(%arg0: i32) -> (i32, i32) {
    %c0_i32 = arith.constant 0 : i32
    %c0_i32_0 = arith.constant 0 : i32
    %c0_i32_1 = arith.constant 0 : i32
    return %c0_i32, %c0_i32_0 : i32, i32
  }
  func.func @transform_2(%arg0: i32) -> (i32, i32) {
    %c0_i32 = arith.constant 0 : i32
    %c0_i32_0 = arith.constant 0 : i32
    %c0_i32_1 = arith.constant 0 : i32
    return %c0_i32, %c0_i32_0 : i32, i32
  }
  func.func @transform_3(%arg0: i32) -> (i32, i32, i32) {
    %c0_i32 = arith.constant 0 : i32
    %c0_i32_0 = arith.constant 0 : i32
    %c0_i32_1 = arith.constant 0 : i32
    %c0_i32_2 = arith.constant 0 : i32
    return %c0_i32, %c0_i32_0, %c0_i32_1 : i32, i32, i32
  }
  func.func @transform_4(%arg0: i32) -> (i32, i32) {
    %c0_i32 = arith.constant 0 : i32
    %c0_i32_0 = arith.constant 0 : i32
    %c0_i32_1 = arith.constant 0 : i32
    return %c0_i32, %c0_i32_0 : i32, i32
  }
  func.func @transform_5(%arg0: i32) -> (i32, i32, i32, i32) {
    %c0_i32 = arith.constant 0 : i32
    %c0_i32_0 = arith.constant 0 : i32
    %c0_i32_1 = arith.constant 0 : i32
    %c0_i32_2 = arith.constant 0 : i32
    return %arg0, %c0_i32, %c0_i32_0, %c0_i32_1 : i32, i32, i32, i32
  }
}

</mosaic_0001>

<llo_original>
// kernel: tpu_custom_call.1
$region0: #{tpu_custom_call.1}
  #allocation0 [shape = 'u32[]', space=smem, size = 0x4, offset = 0x4, fixed_abs, tag = 'smem constant byte address 0x4 - core index']
  #allocation1 [shape = 'u32[144,128]{1,0:T(1,128)}', space=vmem, size = 0x12000, scoped, tag = 'internal scratch']
  %s0 = inlined_call_operand.hbm [shape: f32[2,8,8,8], index: 0, kind: input, shape index: {}]
  %s1 = inlined_call_operand.hbm [shape: f32[8,16], index: 1, kind: input, shape index: {}]
  %s2 = inlined_call_operand.vmem [shape: f32[1,16], index: 2, kind: input, shape index: {}]
  %s3 = inlined_call_operand.hbm [shape: f32[3,3,16], index: 3, kind: input, shape index: {}]
  %s4 = inlined_call_operand.vmem [shape: f32[1,16], index: 4, kind: input, shape index: {}]
  %s5 = inlined_call_operand.vmem [shape: f32[2,6,6,16], index: 5, kind: output, shape index: {}]
  %s6 = sld [smem:[#allocation0]]
  $region65: #{tpu_custom_call.1} parent=0
    _
  %s8 = ssub.s32 1, %s6
  %s9 = scalar_select 0, %s8, %s6
  $region1: #{tpu_custom_call.1} parent=0
    #allocation2 [shape = 'u8[65536]{0}', space=vmem, size = 0x10000, scoped, tag = 'input window, operand 0']
    #allocation3 [shape = 's32[2]{0}', space=sflag, size = 0x8, scoped, tag = 'scoped memory for tpu_custom_call.1']
    #allocation4 [shape = 'u8[4096]{0}', space=vmem, size = 0x1000, scoped, tag = 'input window, operand 1, single buffered']
    #allocation5 [shape = 's32[1]{0}', space=sflag, size = 0x4, scoped, tag = 'scoped memory for tpu_custom_call.1']
    #allocation6 [shape = 'u8[6144]{0}', space=vmem, size = 0x1800, scoped, tag = 'input window, operand 3, single buffered']
    %10 = vsyncpa [#allocation3], 0
    %s11 = scalar_lea.sflag [#allocation3], 1
    %12 = vsyncpa %s11, 0
    %13 = vsyncpa [#allocation5], 0
    loop: start=0, step=1, limit=4
    $region2: #{tpu_custom_call.1} parent=1 // loop_pre_header
      _
    $region3: #{tpu_custom_call.1} parent=1 // loop_header
      %s15 = sphi 0, %s19
      %p16 = scmp.ge.s32.totalorder %s15, 4
      %s25 = sphi 0, %s27
      %s28 = sphi 0, %s25
      %s29 = sphi 0, %s28
      %s45 = sphi 0, %s29
      %s49 = sphi 0, %s49
      %s51 = sphi 0, %s49
      %s52 = sphi 0, %s51
      %s66 = sphi 0, %s52
      %s70 = sphi 0, %s70
      %s72 = sphi 0, %s70
      %s73 = sphi 0, %s72
      %s87 = sphi 0, %s73
      %s91 = sphi 0, %s91
      %s93 = sphi 0, %s91
      %s94 = sphi 0, %s93
      %s108 = sphi 0, %s94
      %s112 = sphi 0, %s112
      %s114 = sphi 0, %s112
      %s115 = sphi 0, %s114
      %s129 = sphi 0, %s115
      %s135 = sphi 0, %s137
      %s138 = sphi 0, %s135
      %s139 = sphi 0, %s138
      %s155 = sphi 0, %s139
    $region4: #{tpu_custom_call.1} parent=1 // loop_header_branch
      %18 = sbr.rel (%p16) target = $region8
    $region5: #{tpu_custom_call.1} parent=1 // loop_body
      %s20 = ssub.s32 %s15, 1
      %s21 = ssub.s32 %s15, 2
      %s22 = sadd.s32 %s15, 1
      %s23 = ssub.s32 %s15, %s22
      %p24 = scmp.eq.s32.totalorder %s23, 0
      %s26 = sadd.s32 %s25, 1
      %s27 = scalar_select %p24, %s25, %s26
      %p30 = pneg %p24
      %p31 = scmp.eq.s32.totalorder %s15, 1
      %p32 = por %p30, %p31
      %p33 = scmp.ne.s32.totalorder %s25, %s28
      %p34 = scmp.eq.s32.totalorder %s15, 0
      %p35 = por %p33, %p34
      %p36 = scmp.ne.s32.totalorder %s25, %s28
      %p37 = scmp.eq.s32.totalorder %s20, 1
      %p38 = por %p36, %p37
      %p39 = scmp.ne.s32.totalorder %s28, %s29
      %p40 = scmp.eq.s32.totalorder %s20, 0
      %p41 = por %p39, %p40
      %p42 = scmp.ne.s32.totalorder %s28, %s29
      %p43 = scmp.eq.s32.totalorder %s21, 1
      %p44 = por %p42, %p43
      %p46 = scmp.ne.s32.totalorder %s29, %s45
      %p47 = scmp.eq.s32.totalorder %s21, 0
      %p48 = por %p46, %p47
      %s50 = sadd.s32 %s49, 1
      %p53 = scmp.eq.s32.totalorder %s15, 1
      %p54 = scmp.ne.s32.totalorder %s49, %s51
      %p55 = scmp.eq.s32.totalorder %s15, 0
      %p56 = por %p54, %p55
      %p57 = scmp.ne.s32.totalorder %s49, %s51
      %p58 = scmp.eq.s32.totalorder %s20, 1
      %p59 = por %p57, %p58
      %p60 = scmp.ne.s32.totalorder %s51, %s52
      %p61 = scmp.eq.s32.totalorder %s20, 0
      %p62 = por %p60, %p61
      %p63 = scmp.ne.s32.totalorder %s51, %s52
      %p64 = scmp.eq.s32.totalorder %s21, 1
      %p65 = por %p63, %p64
      %p67 = scmp.ne.s32.totalorder %s52, %s66
      %p68 = scmp.eq.s32.totalorder %s21, 0
      %p69 = por %p67, %p68
      %s71 = sadd.s32 %s70, 1
      %p74 = scmp.eq.s32.totalorder %s15, 1
      %p75 = scmp.ne.s32.totalorder %s70, %s72
      %p76 = scmp.eq.s32.totalorder %s15, 0
      %p77 = por %p75, %p76
      %p78 = scmp.ne.s32.totalorder %s70, %s72
      %p79 = scmp.eq.s32.totalorder %s20, 1
      %p80 = por %p78, %p79
      %p81 = scmp.ne.s32.totalorder %s72, %s73
      %p82 = scmp.eq.s32.totalorder %s20, 0
      %p83 = por %p81, %p82
      %p84 = scmp.ne.s32.totalorder %s72, %s73
      %p85 = scmp.eq.s32.totalorder %s21, 1
      %p86 = por %p84, %p85
      %p88 = scmp.ne.s32.totalorder %s73, %s87
      %p89 = scmp.eq.s32.totalorder %s21, 0
      %p90 = por %p88, %p89
      %s92 = sadd.s32 %s91, 1
      %p95 = scmp.eq.s32.totalorder %s15, 1
      %p96 = scmp.ne.s32.totalorder %s91, %s93
      %p97 = scmp.eq.s32.totalorder %s15, 0
      %p98 = por %p96, %p97
      %p99 = scmp.ne.s32.totalorder %s91, %s93
      %p100 = scmp.eq.s32.totalorder %s20, 1
      %p101 = por %p99, %p100
      %p102 = scmp.ne.s32.totalorder %s93, %s94
      %p103 = scmp.eq.s32.totalorder %s20, 0
      %p104 = por %p102, %p103
      %p105 = scmp.ne.s32.totalorder %s93, %s94
      %p106 = scmp.eq.s32.totalorder %s21, 1
      %p107 = por %p105, %p106
      %p109 = scmp.ne.s32.totalorder %s94, %s108
      %p110 = scmp.eq.s32.totalorder %s21, 0
      %p111 = por %p109, %p110
      %s113 = sadd.s32 %s112, 1
      %p116 = scmp.eq.s32.totalorder %s15, 1
      %p117 = scmp.ne.s32.totalorder %s112, %s114
      %p118 = scmp.eq.s32.totalorder %s15, 0
      %p119 = por %p117, %p118
      %p120 = scmp.ne.s32.totalorder %s112, %s114
      %p121 = scmp.eq.s32.totalorder %s20, 1
      %p122 = por %p120, %p121
      %p123 = scmp.ne.s32.totalorder %s114, %s115
      %p124 = scmp.eq.s32.totalorder %s20, 0
      %p125 = por %p123, %p124
      %p126 = scmp.ne.s32.totalorder %s114, %s115
      %p127 = scmp.eq.s32.totalorder %s21, 1
      %p128 = por %p126, %p127
      %p130 = scmp.ne.s32.totalorder %s115, %s129
      %p131 = scmp.eq.s32.totalorder %s21, 0
      %p132 = por %p130, %p131
      %s133 = ssub.s32 %s15, %s22
      %p134 = scmp.eq.s32.totalorder %s133, 0
      %s136 = sadd.s32 %s135, 1
      %s137 = scalar_select %p134, %s135, %s136
      %p140 = pneg %p134
      %p141 = scmp.eq.s32.totalorder %s15, 1
      %p142 = por %p140, %p141
      %p143 = scmp.ne.s32.totalorder %s135, %s138
      %p144 = scmp.eq.s32.totalorder %s15, 0
      %p145 = por %p143, %p144
      %p146 = scmp.ne.s32.totalorder %s135, %s138
      %p147 = scmp.eq.s32.totalorder %s20, 1
      %p148 = por %p146, %p147
      %p149 = scmp.ne.s32.totalorder %s138, %s139
      %p150 = scmp.eq.s32.totalorder %s20, 0
      %p151 = por %p149, %p150
      %p152 = scmp.ne.s32.totalorder %s138, %s139
      %p153 = scmp.eq.s32.totalorder %s21, 1
      %p154 = por %p152, %p153
      %p156 = scmp.ne.s32.totalorder %s139, %s155
      %p157 = scmp.eq.s32.totalorder %s21, 0
      %p158 = por %p156, %p157
      %p159 = scmp.le.s32.totalorder 1, %s15
      %p160 = scmp.lt.s32.totalorder %s15, 3
      %p161 = pnand %p159, %p160
      %p162 = pneg %p161
      // Predicated region
      $region9: #{tpu_custom_call.1} parent=5 // pred_check
        _
      $region10: #{tpu_custom_call.1} parent=5 // pred_check_branch
        %164 = sbr.rel (%p161) target = $region12
      $region11: #{tpu_custom_call.1} parent=5 // pred_region
        %s165 = ssub.s32 %s15, 1
        // Predicated region
        $region13: #{tpu_custom_call.1} parent=11 // pred_check
          %p166 = pneg %p62
        $region14: #{tpu_custom_call.1} parent=11 // pred_check_branch
          %168 = sbr.rel (%p166) target = $region16
        $region15: #{tpu_custom_call.1} parent=11 // pred_region
          %s170 = ssub.s32 128, 128
          %171 = vsyncadd [#allocation5], %s170
          %s173 = sshll.u32 [#allocation4], 4
          %s174 = int_to_ptr.vmem [resolvable:$true] %s173
          %176 = dma.hbm_to_vmem [thread:$0]  %s1, 128, %s174, [#allocation5]
        $region16: #{tpu_custom_call.1} parent=11 // pred_fallthru
          _
        // Predicated region
        $region17: #{tpu_custom_call.1} parent=11 // pred_check
          %p177 = pneg %p83
        $region18: #{tpu_custom_call.1} parent=11 // pred_check_branch
          %179 = sbr.rel (%p177) target = $region20
        $region19: #{tpu_custom_call.1} parent=11 // pred_region
          _
        $region20: #{tpu_custom_call.1} parent=11 // pred_fallthru
          _
        // Predicated region
        $region21: #{tpu_custom_call.1} parent=11 // pred_check
          %p180 = pneg %p104
        $region22: #{tpu_custom_call.1} parent=11 // pred_check_branch
          %182 = sbr.rel (%p180) target = $region24
        $region23: #{tpu_custom_call.1} parent=11 // pred_region
          %s184 = ssub.s32 192, 192
          %185 = vsyncadd [#allocation5], %s184
          %s186 = sshll.u32 [#allocation6], 4
          %s187 = int_to_ptr.vmem [resolvable:$true] %s186
          %192 = dma.hbm_to_vmem [thread:$0]  %s3, 192, %s187, [#allocation5], 64, 64, 4
        $region24: #{tpu_custom_call.1} parent=11 // pred_fallthru
          _
        // Predicated region
        $region25: #{tpu_custom_call.1} parent=11 // pred_check
          %p193 = pneg %p125
        $region26: #{tpu_custom_call.1} parent=11 // pred_check_branch
          %195 = sbr.rel (%p193) target = $region28
        $region27: #{tpu_custom_call.1} parent=11 // pred_region
          _
        $region28: #{tpu_custom_call.1} parent=11 // pred_fallthru
          _
      $region12: #{tpu_custom_call.1} parent=5 // pred_fallthru
        _
      %p196 = scmp.lt.s32.totalorder %s15, 2
      // Predicated region
      $region29: #{tpu_custom_call.1} parent=5 // pred_check
        %p197 = pneg %p196
      $region30: #{tpu_custom_call.1} parent=5 // pred_check_branch
        %199 = sbr.rel (%p197) target = $region32
      $region31: #{tpu_custom_call.1} parent=5 // pred_region
        // Predicated region
        $region33: #{tpu_custom_call.1} parent=31 // pred_check
          %p200 = pneg %p35
        $region34: #{tpu_custom_call.1} parent=31 // pred_check_branch
          %202 = sbr.rel (%p200) target = $region36
        $region35: #{tpu_custom_call.1} parent=31 // pred_region
          %s203 = sand.u32 %s25, 1
          %s204 = scalar_lea.sflag [#allocation3], %s203
          %s205 = sand.u32 %s25, 1
          %s206 = smul.addr %s205, 64
          %s207 = scalar_lea.vmem [#allocation2], %s206
          %s209 = ssub.s32 1024, 1024
          %210 = vsyncadd %s204, %s209
          %s211 = smul.addr %s15, 8
          %s212 = smul.addr %s211, 128
          %s213 = scalar_lea.hbm %s0, %s212
          %s214 = sshll.u32 %s207, 4
          %s215 = int_to_ptr.vmem [resolvable:$true] %s214
          %220 = dma.hbm_to_vmem [thread:$0]  %s213, 1024, %s215, %s204, 128, 128, 8
        $region36: #{tpu_custom_call.1} parent=31 // pred_fallthru
          _
      $region32: #{tpu_custom_call.1} parent=5 // pred_fallthru
        _
      %p221 = scmp.le.s32.totalorder 1, %s15
      %p222 = scmp.lt.s32.totalorder %s15, 3
      %p223 = pnand %p221, %p222
      %p224 = pneg %p223
      // Predicated region
      $region37: #{tpu_custom_call.1} parent=5 // pred_check
        _
      $region38: #{tpu_custom_call.1} parent=5 // pred_check_branch
        %226 = sbr.rel (%p223) target = $region40
      $region39: #{tpu_custom_call.1} parent=5 // pred_region
        %s227 = ssub.s32 %s15, 1
        %s228 = sand.u32 %s28, 1
        %s229 = scalar_lea.sflag [#allocation3], %s228
        %s230 = sand.u32 %s28, 1
        %s231 = smul.addr %s230, 64
        %s232 = scalar_lea.vmem [#allocation2], %s231
        // Predicated region
        $region41: #{tpu_custom_call.1} parent=39 // pred_check
          %p233 = pneg %p41
        $region42: #{tpu_custom_call.1} parent=39 // pred_check_branch
          %235 = sbr.rel (%p233) target = $region44
        $region43: #{tpu_custom_call.1} parent=39 // pred_region
          %236 = dma.done %s229, 1024
        $region44: #{tpu_custom_call.1} parent=39 // pred_fallthru
          _
        // Predicated region
        $region45: #{tpu_custom_call.1} parent=39 // pred_check
          %p237 = pneg %p62
        $region46: #{tpu_custom_call.1} parent=39 // pred_check_branch
          %239 = sbr.rel (%p237) target = $region48
        $region47: #{tpu_custom_call.1} parent=39 // pred_region
          %240 = dma.done [#allocation5], 128
        $region48: #{tpu_custom_call.1} parent=39 // pred_fallthru
          _
        // Predicated region
        $region49: #{tpu_custom_call.1} parent=39 // pred_check
          %p241 = pneg %p104
        $region50: #{tpu_custom_call.1} parent=39 // pred_check_branch
          %243 = sbr.rel (%p241) target = $region52
        $region51: #{tpu_custom_call.1} parent=39 // pred_region
          %244 = dma.done [#allocation5], 192
        $region52: #{tpu_custom_call.1} parent=39 // pred_fallthru
          _
        %s245 = sand.u32 %s28, 1
        %s246 = scalar_lea.sflag [#allocation3], %s245
        %s247 = sand.u32 %s28, 1
        %s248 = smul.addr %s247, 64
        %s249 = scalar_lea.vmem [#allocation2], %s248
        %p250 = pneg %p41
        %p251 = pneg %p38
        %p252 = pneg %p62
        %p253 = pneg %p59
        %p254 = pneg %p83
        %p255 = pneg %p80
        %p256 = pneg %p104
        %p257 = pneg %p101
        %p258 = pneg %p125
        %p259 = pneg %p122
        %p260 = pneg %p151
        %p261 = pneg %p148
        %p262 = scmp.lt.s32.totalorder %s20, 1
        %s263 = scalar_select %p262, %s20, 1
        %s264 = smul.addr %s263, 6
        %s265 = smul.addr %s264, 8
        %s266 = scalar_lea.vmem %s5, %s265
        %p267 = scmp.lt.s32.totalorder %s20, 1
        %s268 = scalar_select %p267, %s20, 1
        %s269 = smul.addr %s268, 6
        %s270 = smul.addr %s269, 8
        %s271 = scalar_lea.vmem %s5, %s270
        %v272 = vld [vmem:[%s232] sm:$0xff]
        %v273 = vld [vmem:[%s232 + $0x8] sm:$0xff]
        %v274 = vld [vmem:[%s232 + $0x10] sm:$0xff]
        %v275 = vld [vmem:[%s232 + $0x18] sm:$0xff]
        %v276 = vld [vmem:[%s232 + $0x20] sm:$0xff]
        %v277 = vld [vmem:[%s232 + $0x28] sm:$0xff]
        %v278 = vld [vmem:[%s232 + $0x30] sm:$0xff]
        %v279 = vld [vmem:[%s232 + $0x38] sm:$0xff]
        %v280 = vld [vmem:[#allocation4] sm:$0xff]
        %v281 = vld [vmem:[%s2] sm:$0x1]
        %v283 = vlaneseq
        %v284 = vshrl.u32 %v283, 7
        %v285 = vsub.s32 0, %v284
        %v286 = vrot.slane %v281, %v285
        %vm288 = vcmask 64512
        %v290 = vsel %vm288, %v272, 0
        %v293 = vsel %vm288, %v273, 0
        %v296 = vsel %vm288, %v274, 0
        %v299 = vsel %vm288, %v275, 0
        %v302 = vsel %vm288, %v276, 0
        %v305 = vsel %vm288, %v277, 0
        %v308 = vsel %vm288, %v278, 0
        %v311 = vsel %vm288, %v279, 0
        %313 = vmatprep.subr.mxu0 0.0
        %314 = vmatpush1.msra.mxu0 %v280
        %315 = vmatprep.subr.mxu0 0.0
        %316 = vmatpush1.msra.mxu0 0.0
        %317 = vmatprep.subr.mxu0 0.0
        %318 = vmatpush1.msra.mxu0 0.0
        %319 = vmatprep.subr.mxu0 0.0
        %320 = vmatpush1.msra.mxu0 0.0
        %321 = vmatprep.subr.mxu0 0.0
        %322 = vmatpush1.msra.mxu0 0.0
        %323 = vmatprep.subr.mxu0 0.0
        %324 = vmatpush1.msra.mxu0 0.0
        %325 = vmatprep.subr.mxu0 0.0
        %326 = vmatpush1.msra.mxu0 0.0
        %327 = vmatprep.subr.mxu0 0.0
        %328 = vmatpush1.msra.mxu0 0.0
        %329 = vmatprep.subr.mxu0 0.0
        %330 = vmatpush1.msra.mxu0 0.0
        %331 = vmatprep.subr.mxu0 0.0
        %332 = vmatpush1.msra.mxu0 0.0
        %333 = vmatprep.subr.mxu0 0.0
        %334 = vmatpush1.msra.mxu0 0.0
        %335 = vmatprep.subr.mxu0 0.0
        %336 = vmatpush1.msra.mxu0 0.0
        %337 = vmatprep.subr.mxu0 0.0
        %338 = vmatpush1.msra.mxu0 0.0
        %339 = vmatprep.subr.mxu0 0.0
        %340 = vmatpush1.msra.mxu0 0.0
        %341 = vmatprep.subr.mxu0 0.0
        %342 = vmatpush1.msra.mxu0 0.0
        %343 = vmatprep.subr.mxu0 0.0
        %344 = vmatpush1.msra.mxu0 0.0
        %345 = vmatprep.subr.mxu0 0.0
        %346 = vmatpush1.msra.mxu0 0.0
        %347 = vmatprep.subr.mxu0 0.0
        %348 = vmatpush1.msra.mxu0 0.0
        %349 = vmatprep.subr.mxu0 0.0
        %350 = vmatpush1.msra.mxu0 0.0
        %351 = vmatprep.subr.mxu0 0.0
        %352 = vmatpush1.msra.mxu0 0.0
        %353 = vmatprep.subr.mxu0 0.0
        %354 = vmatpush1.msra.mxu0 0.0
        %355 = vmatprep.subr.mxu0 0.0
        %356 = vmatpush1.msra.mxu0 0.0
        %357 = vmatprep.subr.mxu0 0.0
        %358 = vmatpush1.msra.mxu0 0.0
        %359 = vmatprep.subr.mxu0 0.0
        %360 = vmatpush1.msra.mxu0 0.0
        %361 = vmatprep.subr.mxu0 0.0
        %362 = vmatpush1.msra.mxu0 0.0
        %363 = vmatprep.subr.mxu0 0.0
        %364 = vmatpush1.msra.mxu0 0.0
        %365 = vmatprep.subr.mxu0 0.0
        %366 = vmatpush1.msra.mxu0 0.0
        %367 = vmatprep.subr.mxu0 0.0
        %368 = vmatpush1.msra.mxu0 0.0
        %369 = vmatprep.subr.mxu0 0.0
        %370 = vmatpush1.msra.mxu0 0.0
        %371 = vmatprep.subr.mxu0 0.0
        %372 = vmatpush1.msra.mxu0 0.0
        %373 = vmatprep.subr.mxu0 0.0
        %374 = vmatpush1.msra.mxu0 0.0
        %375 = vmatprep.subr.mxu0 0.0
        %376 = vmatpush1.msra.mxu0 0.0
        %377 = vmatprep.mubr.f32.mxu0 0.0
        %378 = vmatmul.mubr.f32.gmra.mrb[0].mxu0 %v290
        %v379 = vpop.f32.mrb[0].mxu0
        %v380 = vadd.f32 %v286, %v379
        %v381 = vpop.f32.mrb[0].mxu0
        %382 = vmatprep.mubr.f32.mxu0 0.0
        %383 = vmatmul.mubr.f32.gmra.mrb[0].mxu0 %v293
        %v384 = vpop.f32.mrb[0].mxu0
        %v385 = vadd.f32 %v286, %v384
        %v386 = vpop.f32.mrb[0].mxu0
        %387 = vmatprep.mubr.f32.mxu0 0.0
        %388 = vmatmul.mubr.f32.gmra.mrb[0].mxu0 %v296
        %v389 = vpop.f32.mrb[0].mxu0
        %v390 = vadd.f32 %v286, %v389
        %v391 = vpop.f32.mrb[0].mxu0
        %392 = vmatprep.mubr.f32.mxu0 0.0
        %393 = vmatmul.mubr.f32.gmra.mrb[0].mxu0 %v299
        %v394 = vpop.f32.mrb[0].mxu0
        %v395 = vadd.f32 %v286, %v394
        %v396 = vpop.f32.mrb[0].mxu0
        %397 = vmatprep.mubr.f32.mxu0 0.0
        %398 = vmatmul.mubr.f32.gmra.mrb[0].mxu0 %v302
        %v399 = vpop.f32.mrb[0].mxu0
        %v400 = vadd.f32 %v286, %v399
        %v401 = vpop.f32.mrb[0].mxu0
        %402 = vmatprep.mubr.f32.mxu0 0.0
        %403 = vmatmul.mubr.f32.gmra.mrb[0].mxu0 %v305
        %v404 = vpop.f32.mrb[0].mxu0
        %v405 = vadd.f32 %v286, %v404
        %v406 = vpop.f32.mrb[0].mxu0
        %407 = vmatprep.mubr.f32.mxu0 0.0
        %408 = vmatmul.mubr.f32.gmra.mrb[0].mxu0 %v308
        %v409 = vpop.f32.mrb[0].mxu0
        %v410 = vadd.f32 %v286, %v409
        %v411 = vpop.f32.mrb[0].mxu0
        %412 = vmatprep.mubr.f32.mxu0 0.0
        %413 = vmatmul.mubr.f32.gmra.mrb[0].mxu0 %v311
        %v414 = vpop.f32.mrb[0].mxu0
        %v415 = vadd.f32 %v286, %v414
        %v416 = vpop.f32.mrb[0].mxu0
        %417 = vdwg.mxu0
        %v418 = vmax.f32 %v380, 0.0
        %v419 = vmax.f32 %v385, 0.0
        %v420 = vmax.f32 %v390, 0.0
        %v421 = vmax.f32 %v395, 0.0
        %v422 = vmax.f32 %v400, 0.0
        %v423 = vmax.f32 %v405, 0.0
        %v424 = vmax.f32 %v410, 0.0
        %v425 = vmax.f32 %v415, 0.0
        %v426 = vld [vmem:[#allocation6] sm:$0x7]
        %v427 = vld [vmem:[#allocation6 + $0x4] sm:$0x7]
        %v428 = vld [vmem:[#allocation6 + $0x8] sm:$0x7]
        %v429 = vlaneseq
        %v430 = vshrl.u32 %v429, 7
        %v431 = vsub.s32 0, %v430
        %v432 = vrot.slane %v426, %v431
        %v433 = vmul.f32 %v418, %v432
        %v434 = vmul.f32 %v419, %v432
        %v435 = vmul.f32 %v420, %v432
        %v436 = vmul.f32 %v421, %v432
        %v437 = vmul.f32 %v422, %v432
        %v438 = vmul.f32 %v423, %v432
        %v439 = vlaneseq
        %v440 = vshrl.u32 %v439, 7
        %v441 = vsub.s32 0, %v440
        %v442 = vrot.slane %v427, %v441
        %v443 = vmul.f32 %v419, %v442
        %v444 = vmul.f32 %v420, %v442
        %v445 = vmul.f32 %v421, %v442
        %v446 = vmul.f32 %v422, %v442
        %v447 = vmul.f32 %v423, %v442
        %v448 = vmul.f32 %v424, %v442
        %v449 = vadd.f32 %v433, %v443
        %v450 = vadd.f32 %v434, %v444
        %v451 = vadd.f32 %v435, %v445
        %v452 = vadd.f32 %v436, %v446
        %v453 = vadd.f32 %v437, %v447
        %v454 = vadd.f32 %v438, %v448
        %v455 = vlaneseq
        %v456 = vshrl.u32 %v455, 7
        %v457 = vsub.s32 0, %v456
        %v458 = vrot.slane %v428, %v457
        %v459 = vmul.f32 %v420, %v458
        %v460 = vmul.f32 %v421, %v458
        %v461 = vmul.f32 %v422, %v458
        %v462 = vmul.f32 %v423, %v458
        %v463 = vmul.f32 %v424, %v458
        %v464 = vmul.f32 %v425, %v458
        %v465 = vadd.f32 %v449, %v459
        %v466 = vadd.f32 %v450, %v460
        %v467 = vadd.f32 %v451, %v461
        %v468 = vadd.f32 %v452, %v462
        %v469 = vadd.f32 %v453, %v463
        %v470 = vadd.f32 %v454, %v464
        %v471 = vlaneseq
        %v472 = vshrl.u32 %v471, 7
        %v473 = vsub.s32 1, %v472
        %v474 = vrot.slane %v426, %v473
        %v475 = vmul.f32 %v418, %v474
        %v476 = vmul.f32 %v419, %v474
        %v477 = vmul.f32 %v420, %v474
        %v478 = vmul.f32 %v421, %v474
        %v479 = vmul.f32 %v422, %v474
        %v480 = vmul.f32 %v423, %v474
        %v481 = vlaneseq
        %v482 = vshrl.u32 %v481, 7
        %v483 = vsub.s32 1, %v482
        %v484 = vrot.slane %v427, %v483
        %v485 = vmul.f32 %v419, %v484
        %v486 = vmul.f32 %v420, %v484
        %v487 = vmul.f32 %v421, %v484
        %v488 = vmul.f32 %v422, %v484
        %v489 = vmul.f32 %v423, %v484
        %v490 = vmul.f32 %v424, %v484
        %v491 = vadd.f32 %v475, %v485
        %v492 = vadd.f32 %v476, %v486
        %v493 = vadd.f32 %v477, %v487
        %v494 = vadd.f32 %v478, %v488
        %v495 = vadd.f32 %v479, %v489
        %v496 = vadd.f32 %v480, %v490
        %v497 = vlaneseq
        %v498 = vshrl.u32 %v497, 7
        %v499 = vsub.s32 1, %v498
        %v500 = vrot.slane %v428, %v499
        %v501 = vmul.f32 %v420, %v500
        %v502 = vmul.f32 %v421, %v500
        %v503 = vmul.f32 %v422, %v500
        %v504 = vmul.f32 %v423, %v500
        %v505 = vmul.f32 %v424, %v500
        %v506 = vmul.f32 %v425, %v500
        %v507 = vadd.f32 %v491, %v501
        %v508 = vadd.f32 %v492, %v502
        %v509 = vadd.f32 %v493, %v503
        %v510 = vadd.f32 %v494, %v504
        %v511 = vadd.f32 %v495, %v505
        %v512 = vadd.f32 %v496, %v506
        %v513 = vlaneseq
        %v514 = vshrl.u32 %v513, 7
        %v515 = vsub.s32 2, %v514
        %v516 = vrot.slane %v426, %v515
        %v517 = vmul.f32 %v418, %v516
        %v518 = vmul.f32 %v419, %v516
        %v519 = vmul.f32 %v420, %v516
        %v520 = vmul.f32 %v421, %v516
        %v521 = vmul.f32 %v422, %v516
        %v522 = vmul.f32 %v423, %v516
        %v523 = vlaneseq
        %v524 = vshrl.u32 %v523, 7
        %v525 = vsub.s32 2, %v524
        %v526 = vrot.slane %v427, %v525
        %v527 = vmul.f32 %v419, %v526
        %v528 = vmul.f32 %v420, %v526
        %v529 = vmul.f32 %v421, %v526
        %v530 = vmul.f32 %v422, %v526
        %v531 = vmul.f32 %v423, %v526
        %v532 = vmul.f32 %v424, %v526
        %v533 = vadd.f32 %v517, %v527
        %v534 = vadd.f32 %v518, %v528
        %v535 = vadd.f32 %v519, %v529
        %v536 = vadd.f32 %v520, %v530
        %v537 = vadd.f32 %v521, %v531
        %v538 = vadd.f32 %v522, %v532
        %v539 = vlaneseq
        %v540 = vshrl.u32 %v539, 7
        %v541 = vsub.s32 2, %v540
        %v542 = vrot.slane %v428, %v541
        %v543 = vmul.f32 %v420, %v542
        %v544 = vmul.f32 %v421, %v542
        %v545 = vmul.f32 %v422, %v542
        %v546 = vmul.f32 %v423, %v542
        %v547 = vmul.f32 %v424, %v542
        %v548 = vmul.f32 %v425, %v542
        %v549 = vadd.f32 %v533, %v543
        %v550 = vadd.f32 %v534, %v544
        %v551 = vadd.f32 %v535, %v545
        %v552 = vadd.f32 %v536, %v546
        %v553 = vadd.f32 %v537, %v547
        %v554 = vadd.f32 %v538, %v548
        %v561 = vrot.slane %v507, 1
        %v562 = vrot.slane %v508, 1
        %v563 = vrot.slane %v509, 1
        %v564 = vrot.slane %v510, 1
        %v565 = vrot.slane %v511, 1
        %v566 = vrot.slane %v512, 1
        %v573 = vadd.f32 %v465, %v561
        %v574 = vadd.f32 %v466, %v562
        %v575 = vadd.f32 %v467, %v563
        %v576 = vadd.f32 %v468, %v564
        %v577 = vadd.f32 %v469, %v565
        %v578 = vadd.f32 %v470, %v566
        %v585 = vrot.slane %v549, 2
        %v586 = vrot.slane %v550, 2
        %v587 = vrot.slane %v551, 2
        %v588 = vrot.slane %v552, 2
        %v589 = vrot.slane %v553, 2
        %v590 = vrot.slane %v554, 2
        %v597 = vadd.f32 %v573, %v585
        %v598 = vadd.f32 %v574, %v586
        %v599 = vadd.f32 %v575, %v587
        %v600 = vadd.f32 %v576, %v588
        %v601 = vadd.f32 %v577, %v589
        %v602 = vadd.f32 %v578, %v590
        %v603 = vld [vmem:[%s4] sm:$0x1]
        %v605 = vlaneseq
        %v606 = vshrl.u32 %v605, 7
        %v607 = vsub.s32 0, %v606
        %v608 = vrot.slane %v603, %v607
        %v610 = vadd.f32 %v597, %v608
        %v611 = vadd.f32 %v598, %v608
        %v612 = vadd.f32 %v599, %v608
        %v613 = vadd.f32 %v600, %v608
        %v614 = vadd.f32 %v601, %v608
        %v615 = vadd.f32 %v602, %v608
        %v616 = vmax.f32 %v610, 0.0
        %v617 = vmax.f32 %v611, 0.0
        %v618 = vmax.f32 %v612, 0.0
        %v619 = vmax.f32 %v613, 0.0
        %v620 = vmax.f32 %v614, 0.0
        %v621 = vmax.f32 %v615, 0.0
        %vm622 = vcmask 128000
        %623 = vst.msk [vmem:[%s271] sm:$0x3f] %vm622, %v616
        %624 = vst.msk [vmem:[%s271 + $0x8] sm:$0x3f] %vm622, %v617
        %625 = vst.msk [vmem:[%s271 + $0x10] sm:$0x3f] %vm622, %v618
        %626 = vst.msk [vmem:[%s271 + $0x18] sm:$0x3f] %vm622, %v619
        %627 = vst.msk [vmem:[%s271 + $0x20] sm:$0x3f] %vm622, %v620
        %628 = vst.msk [vmem:[%s271 + $0x28] sm:$0x3f] %vm622, %v621
        %p629 = scmp.lt.s32.totalorder %s20, 1
        %s630 = scalar_select %p629, %s20, 1
        %s631 = smul.addr %s630, 6
        %s632 = smul.addr %s631, 8
        %s633 = scalar_lea.vmem %s5, %s632
        // Predicated region
        $region53: #{tpu_custom_call.1} parent=39 // pred_check
          %p634 = pneg %p148
        $region54: #{tpu_custom_call.1} parent=39 // pred_check_branch
          %636 = sbr.rel (%p634) target = $region56
        $region55: #{tpu_custom_call.1} parent=39 // pred_region
          _
        $region56: #{tpu_custom_call.1} parent=39 // pred_fallthru
          _
      $region40: #{tpu_custom_call.1} parent=5 // pred_fallthru
        _
      %p637 = scmp.le.s32.totalorder 2, %s15
      // Predicated region
      $region57: #{tpu_custom_call.1} parent=5 // pred_check
        %p638 = pneg %p637
      $region58: #{tpu_custom_call.1} parent=5 // pred_check_branch
        %640 = sbr.rel (%p638) target = $region60
      $region59: #{tpu_custom_call.1} parent=5 // pred_region
        %s641 = ssub.s32 %s15, 2
        // Predicated region
        $region61: #{tpu_custom_call.1} parent=59 // pred_check
          %p642 = pneg %p154
        $region62: #{tpu_custom_call.1} parent=59 // pred_check_branch
          %644 = sbr.rel (%p642) target = $region64
        $region63: #{tpu_custom_call.1} parent=59 // pred_region
          %p645 = scmp.lt.s32.totalorder %s21, 1
          %s646 = scalar_select %p645, %s21, 1
          %s647 = smul.addr %s646, 6
          %s648 = smul.addr %s647, 8
          %s649 = scalar_lea.vmem %s5, %s648
        $region64: #{tpu_custom_call.1} parent=59 // pred_fallthru
          _
      $region60: #{tpu_custom_call.1} parent=5 // pred_fallthru
        _
    $region6: #{tpu_custom_call.1} parent=1 // loop_footer
      %s19 = sadd.s32 1, %s15
    $region7: #{tpu_custom_call.1} parent=1 // loop_footer_branch
      %14 = sbr.rel target = $region3
    $region8: #{tpu_custom_call.1} parent=1 // loop_exit
      _
    %650 = vsyncpa [#allocation3], 1
    %s651 = scalar_lea.sflag [#allocation3], 1
    %652 = vsyncpa %s651, 1
    %653 = vsyncpa [#allocation5], 1

</llo_original>
